<compile_context>
chip_gen: v7x
topology: tpu7x:2x2x1
jax: 0.10.0
libtpu: 0.0.40
codegen_flags: <defaults>
</compile_context>

<pallas_src>
import jax
import jax.numpy as jnp
from jax import lax
from jax.experimental import pallas as pl
from jax.experimental.pallas import tpu as pltpu

LANE = 128
_EPS = 1e-6                           # BatchNorm2d eps used by SharedMLP (spec)


def _round_up(x, m):
    return (x + m - 1) // m * m


def _tpu_vmem_bytes():
    try:
        info = pltpu.get_tpu_info()
    except Exception:
        return 64 << 20
    for attr in ("vmem_capacity_bytes", "vmem_bytes", "vmem_size_bytes"):
        v = getattr(info, attr, None)
        if isinstance(v, int) and v > 0:
            return v
    return 64 << 20


_VMEM_PHYS = _tpu_vmem_bytes()
# 128 MiB parts (v5e / v6e): big tiles amortize per-step overhead.
# 64 MiB parts (v7x): smaller cap keeps the double-buffered footprint safe.
_ROW_CAP = 2048 if _VMEM_PHYS >= (96 << 20) else 512
_VMEM_LIMIT = int(min(max(_VMEM_PHYS - (16 << 20), 32 << 20), 100 << 20))


def _row_tile(m, cap):
    """Row tile: big as allowed, but >=2 grid steps when possible (v7x megacore)."""
    mr = _round_up(m, 8)
    if mr > cap:
        return cap
    if mr >= 64:
        return _round_up((mr + 1) // 2, 8)
    return mr


def _apply_act(h, act):
    if act is None:
        return h
    if act == "relu":
        return jnp.maximum(h, 0.0)
    _, slope = act                     # ("lrelu", slope)
    return jnp.where(h >= 0, h, slope * h)


def _compiler_params():
    return pltpu.CompilerParams(dimension_semantics=("parallel",),
                                vmem_limit_bytes=_VMEM_LIMIT)


# ------------------------------ Pallas kernels ------------------------------ #

def _make_linear_bias_act_kernel(act):
    """One row tile: y = act(x @ W + b)   (no BatchNorm)."""
    def kernel(x_ref, w_ref, aff_ref, o_ref):
        h = jnp.dot(x_ref[...], w_ref[...], preferred_element_type=jnp.float32)
        h = h + aff_ref[0:1, :]                             # packed bias row (f32)
        o_ref[...] = _apply_act(h, act).astype(o_ref.dtype)
    return kernel


def _stats_kernel(x_ref, w_ref, st_ref):
    """BN pass 1 (stats-only): per-tile channel sum / sum-of-squares of x @ W."""
    h = jnp.dot(x_ref[...], w_ref[...], preferred_element_type=jnp.float32)
    st_ref[0:1, :] = jnp.sum(h, axis=0, keepdims=True)
    st_ref[1:2, :] = jnp.sum(h * h, axis=0, keepdims=True)


def _make_bn_matmul_act_kernel(act, has_residual):
    """BN pass 2: out = act( (x @ W) * scale + shift [+ residual] )."""
    def kernel(x_ref, w_ref, aff_ref, *rest):
        if has_residual:
            r_ref, o_ref = rest
        else:
            (o_ref,) = rest
        h = jnp.dot(x_ref[...], w_ref[...], preferred_element_type=jnp.float32)
        h = h * aff_ref[0:1, :] + aff_ref[1:2, :]
        if has_residual:
            h = h + r_ref[...].astype(jnp.float32)
        o_ref[...] = _apply_act(h, act).astype(o_ref.dtype)
    return kernel


def _make_attn_pool_kernel(k, fuse_scores):
    """AttentivePooling on a K-leading [K, TG, C] block:
       scores = softmax_K(x @ Ws); out = sum_K scores * x."""
    def kernel(x_ref, w_ref, o_ref):
        w = w_ref[...]                                       # bf16 [C, C]
        if fuse_scores:                                      # one MXU push for all K
            kk, tg, c = x_ref.shape
            s_all = jnp.dot(x_ref[...].reshape(kk * tg, c), w,
                            preferred_element_type=jnp.float32)
            ss = [s_all[i * tg:(i + 1) * tg] for i in range(k)]
        else:
            ss = [jnp.dot(x_ref[i], w, preferred_element_type=jnp.float32)
                  for i in range(k)]
        m = ss[0]
        for i in range(1, k):
            m = jnp.maximum(m, ss[i])
        num = jnp.zeros_like(m)
        den = jnp.zeros_like(m)
        for i in range(k):
            e = jnp.exp(ss[i] - m)
            den = den + e
            num = num + e * x_ref[i].astype(jnp.float32)
        o_ref[...] = (num * pl.reciprocal(den, approx=True)).astype(o_ref.dtype)
    return kernel


# --------------------------- Pallas kernel wrappers -------------------------- #

def fused_linear(rows, w, bias=None, bn=None, act=None,
                 residual_padded=None, eps=_EPS, return_padded=False):
    """Pointwise SharedMLP on [M, Cin] rows -> [M, Cout] (channels on lanes).

    Cin stays unpadded (full-dim block); Cout is padded to a multiple of 128 for
    lane-dense stores. Output is bf16. With `return_padded` the [mp, Cout_p]
    padded activation is returned so consumers can avoid a pad/slice round-trip.
    `residual_padded` (only for the BN path) is added before the activation.
    """
    m, cin = rows.shape
    cout = w.shape[1]
    cout_p = _round_up(cout, LANE)
    tm = _row_tile(m, _ROW_CAP)
    mp = _round_up(m, tm)
    nt = mp // tm

    xp = jnp.pad(rows.astype(jnp.bfloat16), ((0, mp - m), (0, 0)))
    wp = jnp.pad(w, ((0, 0), (0, cout_p - cout))).astype(jnp.bfloat16)

    x_spec = pl.BlockSpec((tm, cin), lambda i: (i, 0))
    w_spec = pl.BlockSpec((cin, cout_p), lambda i: (0, 0))
    aff_spec = pl.BlockSpec((8, cout_p), lambda i: (0, 0))
    o_spec = pl.BlockSpec((tm, cout_p), lambda i: (i, 0))

    if bn is None:
        assert residual_padded is None
        aff = jnp.zeros((8, cout_p), jnp.float32)
        if bias is not None:
            aff = aff.at[0, :cout].set(bias)
        out = pl.pallas_call(
            _make_linear_bias_act_kernel(act),
            grid=(nt,),
            in_specs=[x_spec, w_spec, aff_spec],
            out_specs=o_spec,
            out_shape=jax.ShapeDtypeStruct((mp, cout_p), jnp.bfloat16),
            compiler_params=_compiler_params(),
        )(xp, wp, aff)
    else:
        # --- BatchNorm path: training-mode batch statistics over all rows. ---
        # Conv bias dropped: it is exactly cancelled by the BN mean subtraction.
        gamma, beta = bn
        st = pl.pallas_call(
            _stats_kernel,
            grid=(nt,),
            in_specs=[x_spec, w_spec],
            out_specs=pl.BlockSpec((8, cout_p), lambda i: (i, 0)),
            out_shape=jax.ShapeDtypeStruct((nt * 8, cout_p), jnp.float32),
            compiler_params=_compiler_params(),
        )(xp, wp)
        st = st.reshape(nt, 8, cout_p)
        mean = jnp.sum(st[:, 0, :], axis=0) / m              # padded rows contribute 0
        var = jnp.maximum(jnp.sum(st[:, 1, :], axis=0) / m - mean * mean, 0.0)
        scale = jnp.pad(gamma, (0, cout_p - cout)) * lax.rsqrt(var + eps)
        shift = jnp.pad(beta, (0, cout_p - cout)) - mean * scale
        aff = jnp.zeros((8, cout_p), jnp.float32).at[0].set(scale).at[1].set(shift)

        if residual_padded is None:
            out = pl.pallas_call(
                _make_bn_matmul_act_kernel(act, has_residual=False),
                grid=(nt,),
                in_specs=[x_spec, w_spec, aff_spec],
                out_specs=o_spec,
                out_shape=jax.ShapeDtypeStruct((mp, cout_p), jnp.bfloat16),
                compiler_params=_compiler_params(),
            )(xp, wp, aff)
        else:
            r = residual_padded.astype(jnp.bfloat16)
            assert r.shape == (mp, cout_p), (r.shape, (mp, cout_p))
            r_spec = pl.BlockSpec((tm, cout_p), lambda i: (i, 0))
            out = pl.pallas_call(
                _make_bn_matmul_act_kernel(act, has_residual=True),
                grid=(nt,),
                in_specs=[x_spec, w_spec, aff_spec, r_spec],
                out_specs=o_spec,
                out_shape=jax.ShapeDtypeStruct((mp, cout_p), jnp.bfloat16),
                compiler_params=_compiler_params(),
            )(xp, wp, aff, r)

    if return_padded:
        return out
    return out[:m, :cout]


def attn_pool_pallas(x_kgc, w_score):
    """x_kgc [K, G, C] -> attention-pooled [G, C]  (C left unpadded: byte-minimal)."""
    k, g, c = x_kgc.shape
    tg = _row_tile(g, min(_ROW_CAP, 512))
    gp = _round_up(g, tg)
    nt = gp // tg
    xp = jnp.pad(x_kgc.astype(jnp.bfloat16), ((0, 0), (0, gp - g), (0, 0)))
    wp = w_score.astype(jnp.bfloat16)
    fuse_scores = (c % LANE == 0)
    out = pl.pallas_call(
        _make_attn_pool_kernel(k, fuse_scores),
        grid=(nt,),
        in_specs=[pl.BlockSpec((k, tg, c), lambda i: (0, i, 0)),
                  pl.BlockSpec((c, c), lambda i: (0, 0))],
        out_specs=pl.BlockSpec((tg, c), lambda i: (i, 0)),
        out_shape=jax.ShapeDtypeStruct((gp, c), jnp.bfloat16),
        compiler_params=_compiler_params(),
    )(xp, wp)
    return out[:g]


# ----------------------------- pure-JAX reference ---------------------------- #

def ref_linear(rows, w, bias=None, bn=None, act=None, eps=_EPS):
    h = jnp.dot(rows.astype(jnp.bfloat16), w.astype(jnp.bfloat16),
                preferred_element_type=jnp.float32)
    if bias is not None:
        h = h + bias[None, :]
    if bn is not None:
        gamma, beta = bn
        mu = jnp.mean(h, axis=0, keepdims=True)
        var = jnp.mean(jnp.square(h - mu), axis=0, keepdims=True)
        h = (h - mu) * lax.rsqrt(var + eps) * gamma[None, :] + beta[None, :]
    return _apply_act(h, act)


def ref_attn_pool(x_kgc, w_score):
    k, g, c = x_kgc.shape
    x32 = x_kgc.astype(jnp.float32)
    s = jnp.dot(x32.reshape(k * g, c).astype(jnp.bfloat16),
                w_score.astype(jnp.bfloat16),
                preferred_element_type=jnp.float32).reshape(k, g, c)
    s = jax.nn.softmax(s, axis=0)
    return jnp.sum(s * x32, axis=0)


# --------------------------------- model glue -------------------------------- #

def square_distance(a, b):
    diff = a[:, :, None, :] - b[:, None, :, :]
    return jnp.sum(diff * diff, axis=-1)


def index_points(points, idx):
    return jax.vmap(lambda p, i: p[i])(points, idx)


def knn_jax(coords, k):
    d = square_distance(coords, coords)
    neg_d, idx = lax.top_k(-d, k)
    return idx.astype(jnp.int32), jnp.maximum(-neg_d, 0.0)    # (idx, squared dists)


def apply_linear(rows, w, b, bn, act, use_pallas):
    fn = fused_linear if use_pallas else ref_linear
    return fn(rows, w, b, bn, act)


def shared_mlp(x, w, b, bn, act, use_pallas):
    """Pointwise SharedMLP on a channels-last tensor [..., Cin] -> [..., Cout]."""
    lead = x.shape[:-1]
    out = apply_linear(x.reshape(-1, x.shape[-1]), w, b, bn, act, use_pallas)
    return out.reshape(*lead, out.shape[-1])


def local_spatial_encoding(coords, feats, idx, sqdist, lse_p, use_pallas):
    b, n, k = idx.shape
    w, bb, gamma, beta = lse_p
    neigh = index_points(coords, idx)                                    # [B,N,K,3]
    center = jnp.broadcast_to(coords[:, :, None, :], neigh.shape)        # [B,N,K,3]
    enc_in = jnp.concatenate([center, neigh, center - neigh, sqdist[..., None]], axis=-1)
    enc = shared_mlp(enc_in, w, bb, (gamma, beta), "relu", use_pallas)   # [B,N,K,d]
    feats_rep = jnp.broadcast_to(feats[:, :, None, :], (b, n, k, feats.shape[-1]))
    return jnp.concatenate([enc, feats_rep.astype(enc.dtype)], axis=-1)  # [B,N,K,2d]


def attentive_pooling(x, w_score, mlp_p, use_pallas):
    b, n, k, c = x.shape
    x_kgc = jnp.transpose(x.reshape(b * n, k, c), (1, 0, 2))             # [K, G, C]
    pooled = (attn_pool_pallas if use_pallas else ref_attn_pool)(x_kgc, w_score)
    w, bb, gamma, beta = mlp_p
    out = apply_linear(pooled, w, bb, (gamma, beta), "relu", use_pallas)
    return out.reshape(b, n, out.shape[-1])


def local_feature_aggregation(coords, feats, lp, num_neighbors, use_pallas):
    idx, sqdist = knn_jax(coords, num_neighbors)
    w1, b1 = lp["mlp1"]
    x = shared_mlp(feats, w1, b1, None, ("lrelu", 0.2), use_pallas)
    x = local_spatial_encoding(coords, x, idx, sqdist, lp["lse1"], use_pallas)
    x = attentive_pooling(x, lp["pool1_score"], lp["pool1_mlp"], use_pallas)
    x = local_spatial_encoding(coords, x, idx, sqdist, lp["lse2"], use_pallas)
    x = attentive_pooling(x, lp["pool2_score"], lp["pool2_mlp"], use_pallas)
    w2, b2 = lp["mlp2"]
    ws, bs, gs, bes = lp["shortcut"]
    b, n, _ = x.shape
    if use_pallas:
        # mlp2 output kept in its padded [mp, Cp] layout and fused (residual add
        # + LeakyReLU(0.01)) into the shortcut's BN pass-2 kernel.
        x_rows = x.reshape(b * n, x.shape[-1])
        f_rows = feats.reshape(b * n, feats.shape[-1])
        a_pad = fused_linear(x_rows, w2, bias=b2, act=None, return_padded=True)
        out = fused_linear(f_rows, ws, bias=bs, bn=(gs, bes), act=("lrelu", 0.01),
                           residual_padded=a_pad)
        return out.reshape(b, n, out.shape[-1])
    a = shared_mlp(x, w2, b2, None, None, use_pallas)                    # mlp2
    s = shared_mlp(feats, ws, bs, (gs, bes), None, use_pallas)           # shortcut
    h = a + s
    return jnp.where(h >= 0, h, 0.01 * h)            # nn.LeakyReLU() default slope


def randlanet_forward(params, pts, num_neighbors, decimation, perm, use_pallas):
    b, n, _ = pts.shape
    coords = pts[..., :3]
    wf, bf = params["fc_start"]
    # fc_start + bn_start (BatchNorm2d + LeakyReLU(0.2)) fused into one BN-linear.
    x = shared_mlp(pts, wf, bf, params["bn_start"], ("lrelu", 0.2), use_pallas)
    coords = coords[:, perm]
    x = x[:, perm]
    ratio = 1
    for lp in params["encoder"]:
        n_cur = n // ratio
        x = local_feature_aggregation(coords[:, :n_cur], x[:, :n_cur], lp,
                                      num_neighbors, use_pallas)
        ratio *= decimation
        x = x[:, :n // ratio]
    wm, bm = params["mlp"]
    x = shared_mlp(x, wm, bm, None, "relu", use_pallas)    # SharedMLP(512,512,ReLU)
    # back to the torch layout [B, 512, N // d**4, 1]
    return jnp.transpose(x.astype(jnp.float32), (0, 2, 1))[..., None]


# ----------------------------- parameter creation ---------------------------- #

def init_params(key, d_in):
    keys = iter(jax.random.split(key, 80))

    def lin(cin, cout):
        k1, k2 = jax.random.split(next(keys))
        return (0.1 * jax.random.normal(k1, (cin, cout), jnp.float32),
                0.1 * jax.random.normal(k2, (cout,), jnp.float32))

    def bn(c):
        k1, k2 = jax.random.split(next(keys))
        return (1.0 + 0.1 * jax.random.normal(k1, (c,), jnp.float32),
                0.1 * jax.random.normal(k2, (c,), jnp.float32))

    params = {"fc_start": lin(d_in, 8), "bn_start": bn(8), "encoder": []}
    for din, dout in [(8, 16), (32, 64), (128, 128), (256, 256)]:
        half = dout // 2
        params["encoder"].append({
            "mlp1": lin(din, half),
            "lse1": lin(10, half) + bn(half),
            "pool1_score": 0.1 * jax.random.normal(next(keys), (dout, dout), jnp.float32),
            "pool1_mlp": lin(dout, half) + bn(half),
            "lse2": lin(10, half) + bn(half),
            "pool2_score": 0.1 * jax.random.normal(next(keys), (dout, dout), jnp.float32),
            "pool2_mlp": lin(dout, dout) + bn(dout),
            "mlp2": lin(dout, 2 * dout),
            "shortcut": lin(din, 2 * dout) + bn(2 * dout),
        })
    params["mlp"] = lin(512, 512)
    return params


# ------------------------------------ main ----------------------------------- #

if __name__ == "__main__":
    B, N, D_IN = 2, 256, 6
    NUM_NEIGHBORS, DECIMATION = 4, 4

    key = jax.random.PRNGKey(0)
    k_pts, k_par, k_perm = jax.random.split(key, 3)
    pts = jax.random.uniform(k_pts, (B, N, D_IN), dtype=jnp.float32)
    params = init_params(k_par, D_IN)
    perm = jax.random.permutation(k_perm, N)   # torch.randperm equivalent (fixed seed)

    out = randlanet_forward(params, pts, NUM_NEIGHBORS, DECIMATION, perm, use_pallas=True)
    out = jax.block_until_ready(out)

    ref = randlanet_forward(params, pts, NUM_NEIGHBORS, DECIMATION, perm, use_pallas=False)
    ref = jax.block_until_ready(ref)

    n_final = N // DECIMATION ** 4
    assert out.shape == (B, 512, n_final, 1), out.shape
    rel = float(jnp.linalg.norm(out - ref) / (jnp.linalg.norm(ref) + 1e-8))
    # bf16 activation storage slightly loosens the pallas-vs-f32-reference match.
    assert rel < 3e-2, f"pallas vs reference relative error too large: {rel}"
    print("KERNEL_OK")
</pallas_src>

<mosaic_0001>
module attributes {stable_mosaic.version = 11 : i64} {
  func.func @_stats_kernel(%arg0: i32, %arg1: memref<256x6xbf16, #tpu.memory_space<vmem>>, %arg2: memref<6x128xbf16, #tpu.memory_space<vmem>>, %arg3: memref<8x128xf32, #tpu.memory_space<vmem>>) attributes {dimension_semantics = [#tpu.dimension_semantics<parallel>], iteration_bounds = array<i64: 2>, scalar_prefetch = 0 : i64, scratch_operands = 0 : i64, tpu.core_type = #tpu.core_type<tc>, window_params = [{transform_indices = @transform_0, window_bounds = array<i64: 256, 6>}, {pipeline_mode = #tpu.pipeline_mode<synchronous>, transform_indices = @transform_1, window_bounds = array<i64: 6, 128>}, {transform_indices = @transform_2, window_bounds = array<i64: 8, 128>}]} {
    %c0 = arith.constant 0 : index
    %c0_0 = arith.constant 0 : index
    %0 = vector.load %arg1[%c0, %c0_0] : memref<256x6xbf16, #tpu.memory_space<vmem>>, vector<256x6xbf16>
    %c0_1 = arith.constant 0 : index
    %c0_2 = arith.constant 0 : index
    %1 = vector.load %arg2[%c0_1, %c0_2] : memref<6x128xbf16, #tpu.memory_space<vmem>>, vector<6x128xbf16>
    %cst = arith.constant dense<0.000000e+00> : vector<256x128xf32>
    %2 = tpu.matmul %0, %1, %cst {dimension_numbers = #tpu.dot_dimension_numbers<[1], [0], [0], [1], [0, 0, 1, 1], [], []>} : vector<256x6xbf16>, vector<6x128xbf16>, vector<256x128xf32> -> vector<256x128xf32>
    %cst_3 = arith.constant dense<0.000000e+00> : vector<128xf32>
    %3 = vector.multi_reduction <add>, %2, %cst_3 [0] : vector<256x128xf32> to vector<128xf32>
    %4 = vector.shape_cast %3 : vector<128xf32> to vector<1x128xf32>
    %c0_4 = arith.constant 0 : index
    %c0_5 = arith.constant 0 : index
    %5 = vector.load %arg3[%c0_4, %c0_5] : memref<8x128xf32, #tpu.memory_space<vmem>>, vector<1x128xf32>
    tpu.vector_store %arg3[%c0_4, %c0_5], %4 {strides = array<i32>} : memref<8x128xf32, #tpu.memory_space<vmem>>, vector<1x128xf32>,
    %6 = arith.mulf %2, %2 : vector<256x128xf32>
    %cst_6 = arith.constant dense<0.000000e+00> : vector<128xf32>
    %7 = vector.multi_reduction <add>, %6, %cst_6 [0] : vector<256x128xf32> to vector<128xf32>
    %8 = vector.shape_cast %7 : vector<128xf32> to vector<1x128xf32>
    %c1 = arith.constant 1 : index
    %c0_7 = arith.constant 0 : index
    %9 = vector.load %arg3[%c1, %c0_7] : memref<8x128xf32, #tpu.memory_space<vmem>>, vector<1x128xf32>
    tpu.vector_store %arg3[%c1, %c0_7], %8 {strides = array<i32>} : memref<8x128xf32, #tpu.memory_space<vmem>>, vector<1x128xf32>,
    return
  }
  func.func @transform_0(%arg0: i32) -> (i32, i32) {
    %c0_i32 = arith.constant 0 : i32
    %c0_i32_0 = arith.constant 0 : i32
    return %arg0, %c0_i32 : i32, i32
  }
  func.func @transform_1(%arg0: i32) -> (i32, i32) {
    %c0_i32 = arith.constant 0 : i32
    %c0_i32_0 = arith.constant 0 : i32
    %c0_i32_1 = arith.constant 0 : i32
    return %c0_i32, %c0_i32_0 : i32, i32
  }
  func.func @transform_2(%arg0: i32) -> (i32, i32) {
    %c0_i32 = arith.constant 0 : i32
    %c0_i32_0 = arith.constant 0 : i32
    return %arg0, %c0_i32 : i32, i32
  }
}

</mosaic_0001>

<llo_original>
// kernel: tpu_custom_call.1
$region0: #{tpu_custom_call.1}
  #allocation0 [shape = 'u32[]', space=smem, size = 0x4, offset = 0x4, fixed_abs, tag = 'smem constant byte address 0x4 - core index']
  #allocation1 [shape = 'u32[144,128]{1,0:T(1,128)}', space=vmem, size = 0x12000, scoped, tag = 'internal scratch']
  %s0 = inlined_call_operand.vmem [shape: bf16[512,6], index: 0, kind: input, shape index: {}]
  %s1 = inlined_call_operand.vmem [shape: bf16[6,128], index: 1, kind: input, shape index: {}]
  %s2 = inlined_call_operand.hbm [shape: f32[16,128], index: 2, kind: output, shape index: {}]
  %s3 = sld [smem:[#allocation0]]
  $region41: #{tpu_custom_call.1} parent=0
    _
  %s5 = ssub.s32 1, %s3
  %s6 = scalar_select 0, %s5, %s3
  $region1: #{tpu_custom_call.1} parent=0
    #allocation2 [shape = 'u8[8192]{0}', space=vmem, size = 0x2000, scoped, tag = 'output window, operand 0']
    #allocation3 [shape = 's32[2]{0}', space=sflag, size = 0x8, scoped, tag = 'scoped memory for tpu_custom_call.1']
    %7 = vsyncpa [#allocation3], 0
    %s8 = scalar_lea.sflag [#allocation3], 1
    %9 = vsyncpa %s8, 0
    loop: start=0, step=1, limit=4
    $region2: #{tpu_custom_call.1} parent=1 // loop_pre_header
      _
    $region3: #{tpu_custom_call.1} parent=1 // loop_header
      %s11 = sphi 0, %s15
      %p12 = scmp.ge.s32.totalorder %s11, 4
      %s21 = sphi 0, %s23
      %s24 = sphi 0, %s21
      %s25 = sphi 0, %s24
      %s41 = sphi 0, %s25
      %s45 = sphi 0, %s45
      %s47 = sphi 0, %s45
      %s48 = sphi 0, %s47
      %s62 = sphi 0, %s48
      %s68 = sphi 0, %s70
      %s71 = sphi 0, %s68
      %s72 = sphi 0, %s71
      %s88 = sphi 0, %s72
    $region4: #{tpu_custom_call.1} parent=1 // loop_header_branch
      %14 = sbr.rel (%p12) target = $region8
    $region5: #{tpu_custom_call.1} parent=1 // loop_body
      %s16 = ssub.s32 %s11, 1
      %s17 = ssub.s32 %s11, 2
      %s18 = sadd.s32 %s11, 1
      %s19 = ssub.s32 %s11, %s18
      %p20 = scmp.eq.s32.totalorder %s19, 0
      %s22 = sadd.s32 %s21, 1
      %s23 = scalar_select %p20, %s21, %s22
      %p26 = pneg %p20
      %p27 = scmp.eq.s32.totalorder %s11, 1
      %p28 = por %p26, %p27
      %p29 = scmp.ne.s32.totalorder %s21, %s24
      %p30 = scmp.eq.s32.totalorder %s11, 0
      %p31 = por %p29, %p30
      %p32 = scmp.ne.s32.totalorder %s21, %s24
      %p33 = scmp.eq.s32.totalorder %s16, 1
      %p34 = por %p32, %p33
      %p35 = scmp.ne.s32.totalorder %s24, %s25
      %p36 = scmp.eq.s32.totalorder %s16, 0
      %p37 = por %p35, %p36
      %p38 = scmp.ne.s32.totalorder %s24, %s25
      %p39 = scmp.eq.s32.totalorder %s17, 1
      %p40 = por %p38, %p39
      %p42 = scmp.ne.s32.totalorder %s25, %s41
      %p43 = scmp.eq.s32.totalorder %s17, 0
      %p44 = por %p42, %p43
      %s46 = sadd.s32 %s45, 1
      %p49 = scmp.eq.s32.totalorder %s11, 1
      %p50 = scmp.ne.s32.totalorder %s45, %s47
      %p51 = scmp.eq.s32.totalorder %s11, 0
      %p52 = por %p50, %p51
      %p53 = scmp.ne.s32.totalorder %s45, %s47
      %p54 = scmp.eq.s32.totalorder %s16, 1
      %p55 = por %p53, %p54
      %p56 = scmp.ne.s32.totalorder %s47, %s48
      %p57 = scmp.eq.s32.totalorder %s16, 0
      %p58 = por %p56, %p57
      %p59 = scmp.ne.s32.totalorder %s47, %s48
      %p60 = scmp.eq.s32.totalorder %s17, 1
      %p61 = por %p59, %p60
      %p63 = scmp.ne.s32.totalorder %s48, %s62
      %p64 = scmp.eq.s32.totalorder %s17, 0
      %p65 = por %p63, %p64
      %s66 = ssub.s32 %s11, %s18
      %p67 = scmp.eq.s32.totalorder %s66, 0
      %s69 = sadd.s32 %s68, 1
      %s70 = scalar_select %p67, %s68, %s69
      %p73 = pneg %p67
      %p74 = scmp.eq.s32.totalorder %s11, 1
      %p75 = por %p73, %p74
      %p76 = scmp.ne.s32.totalorder %s68, %s71
      %p77 = scmp.eq.s32.totalorder %s11, 0
      %p78 = por %p76, %p77
      %p79 = scmp.ne.s32.totalorder %s68, %s71
      %p80 = scmp.eq.s32.totalorder %s16, 1
      %p81 = por %p79, %p80
      %p82 = scmp.ne.s32.totalorder %s71, %s72
      %p83 = scmp.eq.s32.totalorder %s16, 0
      %p84 = por %p82, %p83
      %p85 = scmp.ne.s32.totalorder %s71, %s72
      %p86 = scmp.eq.s32.totalorder %s17, 1
      %p87 = por %p85, %p86
      %p89 = scmp.ne.s32.totalorder %s72, %s88
      %p90 = scmp.eq.s32.totalorder %s17, 0
      %p91 = por %p89, %p90
      %p92 = scmp.le.s32.totalorder 1, %s11
      %p93 = scmp.lt.s32.totalorder %s11, 3
      %p94 = pnand %p92, %p93
      %p95 = pneg %p94
      // Predicated region
      $region9: #{tpu_custom_call.1} parent=5 // pred_check
        _
      $region10: #{tpu_custom_call.1} parent=5 // pred_check_branch
        %97 = sbr.rel (%p94) target = $region12
      $region11: #{tpu_custom_call.1} parent=5 // pred_region
        %s98 = ssub.s32 %s11, 1
        // Predicated region
        $region13: #{tpu_custom_call.1} parent=11 // pred_check
          %p99 = pneg %p58
        $region14: #{tpu_custom_call.1} parent=11 // pred_check_branch
          %101 = sbr.rel (%p99) target = $region16
        $region15: #{tpu_custom_call.1} parent=11 // pred_region
          _
        $region16: #{tpu_custom_call.1} parent=11 // pred_fallthru
          _
      $region12: #{tpu_custom_call.1} parent=5 // pred_fallthru
        _
      %p102 = scmp.lt.s32.totalorder %s11, 2
      // Predicated region
      $region17: #{tpu_custom_call.1} parent=5 // pred_check
        %p103 = pneg %p102
      $region18: #{tpu_custom_call.1} parent=5 // pred_check_branch
        %105 = sbr.rel (%p103) target = $region20
      $region19: #{tpu_custom_call.1} parent=5 // pred_region
        // Predicated region
        $region21: #{tpu_custom_call.1} parent=19 // pred_check
          %p106 = pneg %p31
        $region22: #{tpu_custom_call.1} parent=19 // pred_check_branch
          %108 = sbr.rel (%p106) target = $region24
        $region23: #{tpu_custom_call.1} parent=19 // pred_region
          %s109 = smul.u32 32, %s11
          %p110 = scmp.lt.s32.totalorder %s109, 63
          %s111 = scalar_select %p110, %s109, 63
          %s112 = smul.addr %s111, 4
          %s113 = scalar_lea.vmem %s0, %s112
          %s114 = smul.u32 32, %s11
        $region24: #{tpu_custom_call.1} parent=19 // pred_fallthru
          _
      $region20: #{tpu_custom_call.1} parent=5 // pred_fallthru
        _
      %p115 = scmp.le.s32.totalorder 1, %s11
      %p116 = scmp.lt.s32.totalorder %s11, 3
      %p117 = pnand %p115, %p116
      %p118 = pneg %p117
      // Predicated region
      $region25: #{tpu_custom_call.1} parent=5 // pred_check
        _
      $region26: #{tpu_custom_call.1} parent=5 // pred_check_branch
        %120 = sbr.rel (%p117) target = $region28
      $region27: #{tpu_custom_call.1} parent=5 // pred_region
        %s121 = ssub.s32 %s11, 1
        %s122 = smul.u32 32, %s16
        %p123 = scmp.lt.s32.totalorder %s122, 63
        %s124 = scalar_select %p123, %s122, 63
        %s125 = smul.addr %s124, 4
        %s126 = scalar_lea.vmem %s0, %s125
        %p127 = pneg %p37
        %p128 = pneg %p34
        %p129 = pneg %p58
        %p130 = pneg %p55
        %p131 = pneg %p84
        %p132 = pneg %p81
        %s133 = sand.u32 %s71, 1
        %s134 = scalar_lea.sflag [#allocation3], %s133
        %s135 = sand.u32 %s71, 1
        %s136 = smul.addr %s135, 8
        %s137 = scalar_lea.vmem [#allocation2], %s136
        %s138 = smul.u32 32, %s16
        %p139 = scmp.lt.s32.totalorder %s138, 63
        %s140 = scalar_select %p139, %s138, 63
        %s141 = smul.addr %s140, 4
        %s142 = scalar_lea.vmem %s0, %s141
        %s143 = smul.u32 32, %s16
        %v145 = vld [vmem:[%s142] sm:$0xf]
        %v146 = vld [vmem:[%s142 + $0x4] sm:$0xf]
        %v147 = vld [vmem:[%s142 + $0x8] sm:$0xf]
        %v148 = vld [vmem:[%s142 + $0xc] sm:$0xf]
        %v149 = vld [vmem:[%s142 + $0x10] sm:$0xf]
        %v150 = vld [vmem:[%s142 + $0x14] sm:$0xf]
        %v151 = vld [vmem:[%s142 + $0x18] sm:$0xf]
        %v152 = vld [vmem:[%s142 + $0x1c] sm:$0xf]
        %v153 = vld [vmem:[%s142 + $0x20] sm:$0xf]
        %v154 = vld [vmem:[%s142 + $0x24] sm:$0xf]
        %v155 = vld [vmem:[%s142 + $0x28] sm:$0xf]
        %v156 = vld [vmem:[%s142 + $0x2c] sm:$0xf]
        %v157 = vld [vmem:[%s142 + $0x30] sm:$0xf]
        %v158 = vld [vmem:[%s142 + $0x34] sm:$0xf]
        %v159 = vld [vmem:[%s142 + $0x38] sm:$0xf]
        %v160 = vld [vmem:[%s142 + $0x3c] sm:$0xf]
        %v161 = vld [vmem:[%s142 + $0x40] sm:$0xf]
        %v162 = vld [vmem:[%s142 + $0x44] sm:$0xf]
        %v163 = vld [vmem:[%s142 + $0x48] sm:$0xf]
        %v164 = vld [vmem:[%s142 + $0x4c] sm:$0xf]
        %v165 = vld [vmem:[%s142 + $0x50] sm:$0xf]
        %v166 = vld [vmem:[%s142 + $0x54] sm:$0xf]
        %v167 = vld [vmem:[%s142 + $0x58] sm:$0xf]
        %v168 = vld [vmem:[%s142 + $0x5c] sm:$0xf]
        %v169 = vld [vmem:[%s142 + $0x60] sm:$0xf]
        %v170 = vld [vmem:[%s142 + $0x64] sm:$0xf]
        %v171 = vld [vmem:[%s142 + $0x68] sm:$0xf]
        %v172 = vld [vmem:[%s142 + $0x6c] sm:$0xf]
        %v173 = vld [vmem:[%s142 + $0x70] sm:$0xf]
        %v174 = vld [vmem:[%s142 + $0x74] sm:$0xf]
        %v175 = vld [vmem:[%s142 + $0x78] sm:$0xf]
        %v176 = vld [vmem:[%s142 + $0x7c] sm:$0xf]
        %v177 = vld [vmem:[%s1] sm:$0x7]
        %v210 = vunpack.c.l.b16 %v145
        %v211 = vunpack.c.l.b16 %v146
        %v212 = vunpack.c.l.b16 %v147
        %v213 = vunpack.c.l.b16 %v148
        %v214 = vunpack.c.l.b16 %v149
        %v215 = vunpack.c.l.b16 %v150
        %v216 = vunpack.c.l.b16 %v151
        %v217 = vunpack.c.l.b16 %v152
        %v218 = vunpack.c.l.b16 %v153
        %v219 = vunpack.c.l.b16 %v154
        %v220 = vunpack.c.l.b16 %v155
        %v221 = vunpack.c.l.b16 %v156
        %v222 = vunpack.c.l.b16 %v157
        %v223 = vunpack.c.l.b16 %v158
        %v224 = vunpack.c.l.b16 %v159
        %v225 = vunpack.c.l.b16 %v160
        %v226 = vunpack.c.l.b16 %v161
        %v227 = vunpack.c.l.b16 %v162
        %v228 = vunpack.c.l.b16 %v163
        %v229 = vunpack.c.l.b16 %v164
        %v230 = vunpack.c.l.b16 %v165
        %v231 = vunpack.c.l.b16 %v166
        %v232 = vunpack.c.l.b16 %v167
        %v233 = vunpack.c.l.b16 %v168
        %v234 = vunpack.c.l.b16 %v169
        %v235 = vunpack.c.l.b16 %v170
        %v236 = vunpack.c.l.b16 %v171
        %v237 = vunpack.c.l.b16 %v172
        %v238 = vunpack.c.l.b16 %v173
        %v239 = vunpack.c.l.b16 %v174
        %v240 = vunpack.c.l.b16 %v175
        %v241 = vunpack.c.l.b16 %v176
        %v242 = vpack.c.b16 %v211, %v210
        %v243 = vpack.c.b16 %v213, %v212
        %v244 = vpack.c.b16 %v215, %v214
        %v245 = vpack.c.b16 %v217, %v216
        %v246 = vpack.c.b16 %v219, %v218
        %v247 = vpack.c.b16 %v221, %v220
        %v248 = vpack.c.b16 %v223, %v222
        %v249 = vpack.c.b16 %v225, %v224
        %v250 = vpack.c.b16 %v227, %v226
        %v251 = vpack.c.b16 %v229, %v228
        %v252 = vpack.c.b16 %v231, %v230
        %v253 = vpack.c.b16 %v233, %v232
        %v254 = vpack.c.b16 %v235, %v234
        %v255 = vpack.c.b16 %v237, %v236
        %v256 = vpack.c.b16 %v239, %v238
        %v257 = vpack.c.b16 %v241, %v240
        %vm258 = vcmask 48128
        %v260 = vsel %vm258, %v242, 0
        %v263 = vsel %vm258, %v243, 0
        %v266 = vsel %vm258, %v244, 0
        %v269 = vsel %vm258, %v245, 0
        %v272 = vsel %vm258, %v246, 0
        %v275 = vsel %vm258, %v247, 0
        %v278 = vsel %vm258, %v248, 0
        %v281 = vsel %vm258, %v249, 0
        %v284 = vsel %vm258, %v250, 0
        %v287 = vsel %vm258, %v251, 0
        %v290 = vsel %vm258, %v252, 0
        %v293 = vsel %vm258, %v253, 0
        %v296 = vsel %vm258, %v254, 0
        %v299 = vsel %vm258, %v255, 0
        %v302 = vsel %vm258, %v256, 0
        %v305 = vsel %vm258, %v257, 0
        %vm307 = vcmask 1042432
        %v309 = vsel %vm307, %v177, 0
        %311 = vmatprep.subr.bf16.mxu0 0
        %312 = vmatpush1.bf16.msra.mxu0 %v309
        %313 = vmatprep.subr.bf16.mxu0 0
        %314 = vmatpush1.bf16.msra.mxu0 0
        %315 = vmatprep.subr.bf16.mxu0 0
        %316 = vmatpush1.bf16.msra.mxu0 0
        %317 = vmatprep.subr.bf16.mxu0 0
        %318 = vmatpush1.bf16.msra.mxu0 0
        %319 = vmatprep.subr.bf16.mxu0 0
        %320 = vmatpush1.bf16.msra.mxu0 0
        %321 = vmatprep.subr.bf16.mxu0 0
        %322 = vmatpush1.bf16.msra.mxu0 0
        %323 = vmatprep.subr.bf16.mxu0 0
        %324 = vmatpush1.bf16.msra.mxu0 0
        %325 = vmatprep.subr.bf16.mxu0 0
        %326 = vmatpush1.bf16.msra.mxu0 0
        %327 = vmatprep.subr.bf16.mxu0 0
        %328 = vmatpush1.bf16.msra.mxu0 0
        %329 = vmatprep.subr.bf16.mxu0 0
        %330 = vmatpush1.bf16.msra.mxu0 0
        %331 = vmatprep.subr.bf16.mxu0 0
        %332 = vmatpush1.bf16.msra.mxu0 0
        %333 = vmatprep.subr.bf16.mxu0 0
        %334 = vmatpush1.bf16.msra.mxu0 0
        %335 = vmatprep.subr.bf16.mxu0 0
        %336 = vmatpush1.bf16.msra.mxu0 0
        %337 = vmatprep.subr.bf16.mxu0 0
        %338 = vmatpush1.bf16.msra.mxu0 0
        %339 = vmatprep.subr.bf16.mxu0 0
        %340 = vmatpush1.bf16.msra.mxu0 0
        %341 = vmatprep.subr.bf16.mxu0 0
        %342 = vmatpush1.bf16.msra.mxu0 0
        %343 = vmatprep.mubr.bf16.mxu0 0
        %344 = vmatmul.mubr.bf16.gmra.mrb[0].mxu0 %v260
        %v345 = vpop.f32.mrb[0].mxu0
        %v346 = vadd.f32 0.0, %v345
        %v347 = vpop.f32.mrb[0].mxu0
        %v348 = vpop.f32.mrb[0].mxu0
        %v349 = vadd.f32 0.0, %v348
        %v350 = vpop.f32.mrb[0].mxu0
        %351 = vmatprep.mubr.bf16.mxu0 0
        %352 = vmatmul.mubr.bf16.gmra.mrb[0].mxu0 %v263
        %v353 = vpop.f32.mrb[0].mxu0
        %v354 = vadd.f32 0.0, %v353
        %v355 = vpop.f32.mrb[0].mxu0
        %v356 = vpop.f32.mrb[0].mxu0
        %v357 = vadd.f32 0.0, %v356
        %v358 = vpop.f32.mrb[0].mxu0
        %359 = vmatprep.mubr.bf16.mxu0 0
        %360 = vmatmul.mubr.bf16.gmra.mrb[0].mxu0 %v266
        %v361 = vpop.f32.mrb[0].mxu0
        %v362 = vadd.f32 0.0, %v361
        %v363 = vpop.f32.mrb[0].mxu0
        %v364 = vpop.f32.mrb[0].mxu0
        %v365 = vadd.f32 0.0, %v364
        %v366 = vpop.f32.mrb[0].mxu0
        %367 = vmatprep.mubr.bf16.mxu0 0
        %368 = vmatmul.mubr.bf16.gmra.mrb[0].mxu0 %v269
        %v369 = vpop.f32.mrb[0].mxu0
        %v370 = vadd.f32 0.0, %v369
        %v371 = vpop.f32.mrb[0].mxu0
        %v372 = vpop.f32.mrb[0].mxu0
        %v373 = vadd.f32 0.0, %v372
        %v374 = vpop.f32.mrb[0].mxu0
        %375 = vmatprep.mubr.bf16.mxu0 0
        %376 = vmatmul.mubr.bf16.gmra.mrb[0].mxu0 %v272
        %v377 = vpop.f32.mrb[0].mxu0
        %v378 = vadd.f32 0.0, %v377
        %v379 = vpop.f32.mrb[0].mxu0
        %v380 = vpop.f32.mrb[0].mxu0
        %v381 = vadd.f32 0.0, %v380
        %v382 = vpop.f32.mrb[0].mxu0
        %383 = vmatprep.mubr.bf16.mxu0 0
        %384 = vmatmul.mubr.bf16.gmra.mrb[0].mxu0 %v275
        %v385 = vpop.f32.mrb[0].mxu0
        %v386 = vadd.f32 0.0, %v385
        %v387 = vpop.f32.mrb[0].mxu0
        %v388 = vpop.f32.mrb[0].mxu0
        %v389 = vadd.f32 0.0, %v388
        %v390 = vpop.f32.mrb[0].mxu0
        %391 = vmatprep.mubr.bf16.mxu0 0
        %392 = vmatmul.mubr.bf16.gmra.mrb[0].mxu0 %v278
        %v393 = vpop.f32.mrb[0].mxu0
        %v394 = vadd.f32 0.0, %v393
        %v395 = vpop.f32.mrb[0].mxu0
        %v396 = vpop.f32.mrb[0].mxu0
        %v397 = vadd.f32 0.0, %v396
        %v398 = vpop.f32.mrb[0].mxu0
        %399 = vmatprep.mubr.bf16.mxu0 0
        %400 = vmatmul.mubr.bf16.gmra.mrb[0].mxu0 %v281
        %v401 = vpop.f32.mrb[0].mxu0
        %v402 = vadd.f32 0.0, %v401
        %v403 = vpop.f32.mrb[0].mxu0
        %v404 = vpop.f32.mrb[0].mxu0
        %v405 = vadd.f32 0.0, %v404
        %v406 = vpop.f32.mrb[0].mxu0
        %407 = vmatprep.mubr.bf16.mxu0 0
        %408 = vmatmul.mubr.bf16.gmra.mrb[0].mxu0 %v284
        %v409 = vpop.f32.mrb[0].mxu0
        %v410 = vadd.f32 0.0, %v409
        %v411 = vpop.f32.mrb[0].mxu0
        %v412 = vpop.f32.mrb[0].mxu0
        %v413 = vadd.f32 0.0, %v412
        %v414 = vpop.f32.mrb[0].mxu0
        %415 = vmatprep.mubr.bf16.mxu0 0
        %416 = vmatmul.mubr.bf16.gmra.mrb[0].mxu0 %v287
        %v417 = vpop.f32.mrb[0].mxu0
        %v418 = vadd.f32 0.0, %v417
        %v419 = vpop.f32.mrb[0].mxu0
        %v420 = vpop.f32.mrb[0].mxu0
        %v421 = vadd.f32 0.0, %v420
        %v422 = vpop.f32.mrb[0].mxu0
        %423 = vmatprep.mubr.bf16.mxu0 0
        %424 = vmatmul.mubr.bf16.gmra.mrb[0].mxu0 %v290
        %v425 = vpop.f32.mrb[0].mxu0
        %v426 = vadd.f32 0.0, %v425
        %v427 = vpop.f32.mrb[0].mxu0
        %v428 = vpop.f32.mrb[0].mxu0
        %v429 = vadd.f32 0.0, %v428
        %v430 = vpop.f32.mrb[0].mxu0
        %431 = vmatprep.mubr.bf16.mxu0 0
        %432 = vmatmul.mubr.bf16.gmra.mrb[0].mxu0 %v293
        %v433 = vpop.f32.mrb[0].mxu0
        %v434 = vadd.f32 0.0, %v433
        %v435 = vpop.f32.mrb[0].mxu0
        %v436 = vpop.f32.mrb[0].mxu0
        %v437 = vadd.f32 0.0, %v436
        %v438 = vpop.f32.mrb[0].mxu0
        %439 = vmatprep.mubr.bf16.mxu0 0
        %440 = vmatmul.mubr.bf16.gmra.mrb[0].mxu0 %v296
        %v441 = vpop.f32.mrb[0].mxu0
        %v442 = vadd.f32 0.0, %v441
        %v443 = vpop.f32.mrb[0].mxu0
        %v444 = vpop.f32.mrb[0].mxu0
        %v445 = vadd.f32 0.0, %v444
        %v446 = vpop.f32.mrb[0].mxu0
        %447 = vmatprep.mubr.bf16.mxu0 0
        %448 = vmatmul.mubr.bf16.gmra.mrb[0].mxu0 %v299
        %v449 = vpop.f32.mrb[0].mxu0
        %v450 = vadd.f32 0.0, %v449
        %v451 = vpop.f32.mrb[0].mxu0
        %v452 = vpop.f32.mrb[0].mxu0
        %v453 = vadd.f32 0.0, %v452
        %v454 = vpop.f32.mrb[0].mxu0
        %455 = vmatprep.mubr.bf16.mxu0 0
        %456 = vmatmul.mubr.bf16.gmra.mrb[0].mxu0 %v302
        %v457 = vpop.f32.mrb[0].mxu0
        %v458 = vadd.f32 0.0, %v457
        %v459 = vpop.f32.mrb[0].mxu0
        %v460 = vpop.f32.mrb[0].mxu0
        %v461 = vadd.f32 0.0, %v460
        %v462 = vpop.f32.mrb[0].mxu0
        %463 = vmatprep.mubr.bf16.mxu0 0
        %464 = vmatmul.mubr.bf16.gmra.mrb[0].mxu0 %v305
        %v465 = vpop.f32.mrb[0].mxu0
        %v466 = vadd.f32 0.0, %v465
        %v467 = vpop.f32.mrb[0].mxu0
        %v468 = vpop.f32.mrb[0].mxu0
        %v469 = vadd.f32 0.0, %v468
        %v470 = vpop.f32.mrb[0].mxu0
        %471 = vdwg.mxu0
        %v472 = vadd.f32 %v346, %v349
        %v473 = vadd.f32 %v472, %v354
        %v474 = vadd.f32 %v473, %v357
        %v475 = vadd.f32 %v474, %v362
        %v476 = vadd.f32 %v475, %v365
        %v477 = vadd.f32 %v476, %v370
        %v478 = vadd.f32 %v477, %v373
        %v479 = vadd.f32 %v478, %v378
        %v480 = vadd.f32 %v479, %v381
        %v481 = vadd.f32 %v480, %v386
        %v482 = vadd.f32 %v481, %v389
        %v483 = vadd.f32 %v482, %v394
        %v484 = vadd.f32 %v483, %v397
        %v485 = vadd.f32 %v484, %v402
        %v486 = vadd.f32 %v485, %v405
        %v487 = vadd.f32 %v486, %v410
        %v488 = vadd.f32 %v487, %v413
        %v489 = vadd.f32 %v488, %v418
        %v490 = vadd.f32 %v489, %v421
        %v491 = vadd.f32 %v490, %v426
        %v492 = vadd.f32 %v491, %v429
        %v493 = vadd.f32 %v492, %v434
        %v494 = vadd.f32 %v493, %v437
        %v495 = vadd.f32 %v494, %v442
        %v496 = vadd.f32 %v495, %v445
        %v497 = vadd.f32 %v496, %v450
        %v498 = vadd.f32 %v497, %v453
        %v499 = vadd.f32 %v498, %v458
        %v500 = vadd.f32 %v499, %v461
        %v501 = vadd.f32 %v500, %v466
        %v502 = vadd.f32 %v501, %v469
        %v503 = vrot.slane %v502, 4
        %v504 = vadd.f32 %v502, %v503
        %v505 = vrot.slane %v504, 2
        %v506 = vadd.f32 %v504, %v505
        %v507 = vrot.slane %v506, 1
        %v508 = vadd.f32 %v506, %v507
        %509 = vst [vmem:[%s137] sm:$0x1] %v508
        %v510 = vmul.f32 %v346, %v346
        %v511 = vmul.f32 %v349, %v349
        %v512 = vmul.f32 %v354, %v354
        %v513 = vmul.f32 %v357, %v357
        %v514 = vmul.f32 %v362, %v362
        %v515 = vmul.f32 %v365, %v365
        %v516 = vmul.f32 %v370, %v370
        %v517 = vmul.f32 %v373, %v373
        %v518 = vmul.f32 %v378, %v378
        %v519 = vmul.f32 %v381, %v381
        %v520 = vmul.f32 %v386, %v386
        %v521 = vmul.f32 %v389, %v389
        %v522 = vmul.f32 %v394, %v394
        %v523 = vmul.f32 %v397, %v397
        %v524 = vmul.f32 %v402, %v402
        %v525 = vmul.f32 %v405, %v405
        %v526 = vmul.f32 %v410, %v410
        %v527 = vmul.f32 %v413, %v413
        %v528 = vmul.f32 %v418, %v418
        %v529 = vmul.f32 %v421, %v421
        %v530 = vmul.f32 %v426, %v426
        %v531 = vmul.f32 %v429, %v429
        %v532 = vmul.f32 %v434, %v434
        %v533 = vmul.f32 %v437, %v437
        %v534 = vmul.f32 %v442, %v442
        %v535 = vmul.f32 %v445, %v445
        %v536 = vmul.f32 %v450, %v450
        %v537 = vmul.f32 %v453, %v453
        %v538 = vmul.f32 %v458, %v458
        %v539 = vmul.f32 %v461, %v461
        %v540 = vmul.f32 %v466, %v466
        %v541 = vmul.f32 %v469, %v469
        %v542 = vadd.f32 %v510, %v511
        %v543 = vadd.f32 %v542, %v512
        %v544 = vadd.f32 %v543, %v513
        %v545 = vadd.f32 %v544, %v514
        %v546 = vadd.f32 %v545, %v515
        %v547 = vadd.f32 %v546, %v516
        %v548 = vadd.f32 %v547, %v517
        %v549 = vadd.f32 %v548, %v518
        %v550 = vadd.f32 %v549, %v519
        %v551 = vadd.f32 %v550, %v520
        %v552 = vadd.f32 %v551, %v521
        %v553 = vadd.f32 %v552, %v522
        %v554 = vadd.f32 %v553, %v523
        %v555 = vadd.f32 %v554, %v524
        %v556 = vadd.f32 %v555, %v525
        %v557 = vadd.f32 %v556, %v526
        %v558 = vadd.f32 %v557, %v527
        %v559 = vadd.f32 %v558, %v528
        %v560 = vadd.f32 %v559, %v529
        %v561 = vadd.f32 %v560, %v530
        %v562 = vadd.f32 %v561, %v531
        %v563 = vadd.f32 %v562, %v532
        %v564 = vadd.f32 %v563, %v533
        %v565 = vadd.f32 %v564, %v534
        %v566 = vadd.f32 %v565, %v535
        %v567 = vadd.f32 %v566, %v536
        %v568 = vadd.f32 %v567, %v537
        %v569 = vadd.f32 %v568, %v538
        %v570 = vadd.f32 %v569, %v539
        %v571 = vadd.f32 %v570, %v540
        %v572 = vadd.f32 %v571, %v541
        %v573 = vrot.slane %v572, 4
        %v574 = vadd.f32 %v572, %v573
        %v575 = vrot.slane %v574, 2
        %v576 = vadd.f32 %v574, %v575
        %v577 = vrot.slane %v576, 1
        %v578 = vadd.f32 %v576, %v577
        %579 = vst [vmem:[%s137 + $0x1] sm:$0x1] %v578
        %s580 = sand.u32 %s71, 1
        %s581 = scalar_lea.sflag [#allocation3], %s580
        %s582 = sand.u32 %s71, 1
        %s583 = smul.addr %s582, 8
        %s584 = scalar_lea.vmem [#allocation2], %s583
        // Predicated region
        $region29: #{tpu_custom_call.1} parent=27 // pred_check
          %p585 = pneg %p81
        $region30: #{tpu_custom_call.1} parent=27 // pred_check_branch
          %587 = sbr.rel (%p585) target = $region32
        $region31: #{tpu_custom_call.1} parent=27 // pred_region
          %s589 = ssub.s32 128, 128
          %590 = vsyncadd %s581, %s589
          %s591 = smul.addr %s16, 128
          %s592 = scalar_lea.hbm %s2, %s591
          %s594 = sshll.u32 %s584, 4
          %s595 = int_to_ptr.vmem [resolvable:$true] %s594
          %597 = dma.vmem_to_hbm [thread:$0]  %s595, 128, %s592, %s581
        $region32: #{tpu_custom_call.1} parent=27 // pred_fallthru
          _
      $region28: #{tpu_custom_call.1} parent=5 // pred_fallthru
        _
      %p598 = scmp.le.s32.totalorder 2, %s11
      // Predicated region
      $region33: #{tpu_custom_call.1} parent=5 // pred_check
        %p599 = pneg %p598
      $region34: #{tpu_custom_call.1} parent=5 // pred_check_branch
        %601 = sbr.rel (%p599) target = $region36
      $region35: #{tpu_custom_call.1} parent=5 // pred_region
        %s602 = ssub.s32 %s11, 2
        // Predicated region
        $region37: #{tpu_custom_call.1} parent=35 // pred_check
          %p603 = pneg %p87
        $region38: #{tpu_custom_call.1} parent=35 // pred_check_branch
          %605 = sbr.rel (%p603) target = $region40
        $region39: #{tpu_custom_call.1} parent=35 // pred_region
          %s606 = sand.u32 %s72, 1
          %s607 = scalar_lea.sflag [#allocation3], %s606
          %s608 = sand.u32 %s72, 1
          %s609 = smul.addr %s608, 8
          %s610 = scalar_lea.vmem [#allocation2], %s609
          %611 = dma.done %s607, 128
        $region40: #{tpu_custom_call.1} parent=35 // pred_fallthru
          _
      $region36: #{tpu_custom_call.1} parent=5 // pred_fallthru
        _
    $region6: #{tpu_custom_call.1} parent=1 // loop_footer
      %s15 = sadd.s32 1, %s11
    $region7: #{tpu_custom_call.1} parent=1 // loop_footer_branch
      %10 = sbr.rel target = $region3
    $region8: #{tpu_custom_call.1} parent=1 // loop_exit
      _
    %612 = vsyncpa [#allocation3], 1
    %s613 = scalar_lea.sflag [#allocation3], 1
    %614 = vsyncpa %s613, 1

</llo_original>
